<compile_context>
chip_gen: v5e
topology: v5e:2x2
jax: 0.10.0
libtpu: 0.0.40
codegen_flags: <defaults>
</compile_context>

<pallas_src>
import math
import jax
import jax.numpy as jnp
from jax.experimental import pallas as pl
from jax.experimental.pallas import tpu as pltpu


def _decoder_kernel(a1blk_ref, z_ref, params_ref, w1_ref, w3_ref,
                    matz_ref, out_ref):
    # a1blk_ref : (B*D, B*D)  block-diag kron(I_B, inv(I - A^T))
    # z_ref     : (B*D, Z)    batch fused into the sublane (M) axis
    # params_ref: (3, Wmax)   row0 = Wa (len Z), row1 = b1 (len H), row2 = b3 (len O)
    # w1_ref    : (Z, H)      fc1 weight, pre-transposed to [in, out]
    # w3_ref    : (H, O)      fc3 weight, pre-transposed to [in, out]
    # matz_ref  : (B*D, Z), out_ref: (B*D, O)
    BD, Z = z_ref.shape
    H = w1_ref.shape[1]
    O = w3_ref.shape[1]

    wa_row = params_ref[0:1, 0:Z]                     # (1, Z)
    b1_row = params_ref[1:2, 0:H]                     # (1, H)
    b3_row = params_ref[2:3, 0:O]                     # (1, O)

    # Hoisted broadcast (JAX does not CSE broadcast_in_dim): one broadcast, used twice.
    wa_b = jnp.broadcast_to(wa_row, (BD, Z))          # (B*D, Z)

    # Whole-batch A1 application as a single MXU pass (block-diagonal matmul).
    mat_z = jnp.dot(a1blk_ref[...], z_ref[...] + wa_b,
                    preferred_element_type=jnp.float32) - wa_b
    matz_ref[...] = mat_z                              # store once; keep value in vregs

    # fc1 + relu and fc3 as single whole-batch matmuls (M = B*D).
    h3 = jnp.maximum(
        jnp.dot(mat_z, w1_ref[...], preferred_element_type=jnp.float32) + b1_row,
        0.0)                                           # (B*D, H)
    logits = jnp.dot(h3, w3_ref[...],
                     preferred_element_type=jnp.float32) + b3_row   # (B*D, O)

    # Softmax over the last axis (== torch dim=2 for the (B, D, O) tensor).
    # Exact division (not approx reciprocal) so rows sum to 1 within f32 precision.
    m = jnp.max(logits, axis=-1, keepdims=True)
    e = jnp.exp(logits - m)
    out_ref[...] = e / jnp.sum(e, axis=-1, keepdims=True)


def mlp_discrete_decoder_forward(input_z, origin_A, Wa, adj_A_tilt,
                                 w1, b1, w3, b3):
    """input_z: [B, D, Z]  origin_A: [D, D]  Wa: [Z]  w1: [H, Z]  w3: [O, H]"""
    B, D, Z = input_z.shape
    H = w1.shape[0]     # out_fc1.weight: (n_hid, n_in_z)  -> torch layout
    O = w3.shape[0]     # out_fc3.weight: (n_out, n_hid)   -> torch layout
    Wmax = max(Z, H, O)

    # Glue: dense matrix inverse has no clean Pallas equivalent (see TODO at top).
    adj_A_new1 = jnp.linalg.inv(
        jnp.eye(D, dtype=jnp.float32) - origin_A.astype(jnp.float32).T)

    # Layout plumbing stays in the wrapper (XLA): fuse batch into the M axis, build the
    # block-diagonal A1 so the per-batch application is one matmul, pre-transpose weights
    # to [in, out], and pack the tiny 1-row params into one operand (fewer input DMAs).
    # NOTE: kron(I_B, A1) scales as (B*D)^2 -- fine while B*D stays a small constant;
    # switch back to a per-batch formulation (or lane-fused layout) at production scale.
    a1_blk = jnp.kron(jnp.eye(B, dtype=jnp.float32), adj_A_new1)      # (B*D, B*D)
    z_2d = input_z.astype(jnp.float32).reshape(B * D, Z)              # contiguous reshape
    w1_t = w1.astype(jnp.float32).T                                   # (Z, H)
    w3_t = w3.astype(jnp.float32).T                                   # (H, O)
    params = jnp.zeros((3, Wmax), dtype=jnp.float32)
    params = params.at[0, :Z].set(Wa.astype(jnp.float32))
    params = params.at[1, :H].set(b1.astype(jnp.float32))
    params = params.at[2, :O].set(b3.astype(jnp.float32))

    # Advisory cost estimate so XLA overlaps this tiny custom call with surrounding ops.
    flops = 2 * (B * D) * ((B * D) * Z + Z * H + H * O)
    bytes_accessed = 4 * ((B * D) * (B * D) + (B * D) * Z + 3 * Wmax
                          + Z * H + H * O + (B * D) * Z + (B * D) * O)
    cost = pl.CostEstimate(flops=flops,
                           transcendentals=(B * D) * O,
                           bytes_accessed=bytes_accessed)

    vmem = pl.BlockSpec(memory_space=pltpu.MemorySpace.VMEM)

    # Single kernel invocation (no grid): every operand / result is one whole-array VMEM
    # block (few tens of KB -> fits trivially on v5e/v6e 128 MiB and v7x 64 MiB).
    mat_z_2d, out_2d = pl.pallas_call(
        _decoder_kernel,
        out_shape=(jax.ShapeDtypeStruct((B * D, Z), jnp.float32),
                   jax.ShapeDtypeStruct((B * D, O), jnp.float32)),
        in_specs=[vmem, vmem, vmem, vmem, vmem],
        out_specs=(vmem, vmem),
        cost_estimate=cost,
    )(a1_blk, z_2d, params, w1_t, w3_t)

    return mat_z_2d.reshape(B, D, Z), out_2d.reshape(B, D, O), adj_A_tilt


def _xavier_normal(key, shape):
    fan_out, fan_in = shape
    std = math.sqrt(2.0 / (fan_in + fan_out))
    return std * jax.random.normal(key, shape, dtype=jnp.float32)


if __name__ == "__main__":
    # Small shapes consistent with the module:
    B = 4            # batch_size
    D = 8            # data_variable_size / n_in_node
    Z = 16           # n_in_z (latent dim)
    H = 32           # n_hid
    O = 8            # n_out (number of discrete classes)

    key = jax.random.PRNGKey(0)
    k_z, k_A, k_wa, k_w1, k_w3, k_tilt = jax.random.split(key, 6)

    input_z = jax.random.normal(k_z, (B, D, Z), dtype=jnp.float32)
    origin_A = 0.1 * jax.random.normal(k_A, (D, D), dtype=jnp.float32)
    Wa = jax.random.normal(k_wa, (Z,), dtype=jnp.float32)
    adj_A_tilt = jax.random.normal(k_tilt, (D, D), dtype=jnp.float32)

    # Deterministic parameter init matching nn.init.xavier_normal_ / zero bias:
    w1 = _xavier_normal(k_w1, (H, Z))          # out_fc1.weight  (n_hid, n_in_z)
    b1 = jnp.zeros((H,), dtype=jnp.float32)    # out_fc1.bias
    w3 = _xavier_normal(k_w3, (O, H))          # out_fc3.weight  (n_out, n_hid)
    b3 = jnp.zeros((O,), dtype=jnp.float32)    # out_fc3.bias
    # (out_fc2 / bn0 / bn1 are unused in forward, so not constructed.)

    mat_z, out, tilt = mlp_discrete_decoder_forward(
        input_z, origin_A, Wa, adj_A_tilt, w1, b1, w3, b3)
    jax.block_until_ready((mat_z, out, tilt))

    # Pure-JAX reference check.
    A1 = jnp.linalg.inv(jnp.eye(D) - origin_A.T)
    matz_expect = jnp.einsum("ij,bjk->bik", A1, input_z + Wa) - Wa
    h3_expect = jax.nn.relu(matz_expect @ w1.T + b1)
    out_expect = jax.nn.softmax(h3_expect @ w3.T + b3, axis=2)

    assert mat_z.shape == (B, D, Z) and out.shape == (B, D, O)
    assert jnp.allclose(mat_z, matz_expect, atol=1e-4), "mat_z mismatch"
    assert jnp.allclose(out, out_expect, atol=1e-4), "softmax output mismatch"
    assert jnp.allclose(tilt, adj_A_tilt), "adj_A_tilt passthrough mismatch"

    print("KERNEL_OK")
</pallas_src>

<mosaic_0001>
module attributes {stable_mosaic.version = 11 : i64} {
  func.func @_decoder_kernel(%arg0: memref<32x32xf32, #tpu.memory_space<vmem>>, %arg1: memref<32x16xf32, #tpu.memory_space<vmem>>, %arg2: memref<3x32xf32, #tpu.memory_space<vmem>>, %arg3: memref<16x32xf32, #tpu.memory_space<vmem>>, %arg4: memref<32x8xf32, #tpu.memory_space<vmem>>, %arg5: memref<32x16xf32, #tpu.memory_space<vmem>>, %arg6: memref<32x8xf32, #tpu.memory_space<vmem>>) attributes {dimension_semantics = [], scalar_prefetch = 0 : i64, scratch_operands = 0 : i64, tpu.core_type = #tpu.core_type<tc>} {
    %c0 = arith.constant 0 : index
    %c0_0 = arith.constant 0 : index
    %0 = vector.load %arg2[%c0, %c0_0] : memref<3x32xf32, #tpu.memory_space<vmem>>, vector<1x16xf32>
    %c1 = arith.constant 1 : index
    %c0_1 = arith.constant 0 : index
    %1 = vector.load %arg2[%c1, %c0_1] : memref<3x32xf32, #tpu.memory_space<vmem>>, vector<1x32xf32>
    %c2 = arith.constant 2 : index
    %c0_2 = arith.constant 0 : index
    %2 = vector.load %arg2[%c2, %c0_2] : memref<3x32xf32, #tpu.memory_space<vmem>>, vector<1x8xf32>
    %3 = vector.shape_cast %0 : vector<1x16xf32> to vector<1x16xf32>
    %4 = vector.broadcast %3 : vector<1x16xf32> to vector<32x16xf32>
    %c0_3 = arith.constant 0 : index
    %c0_4 = arith.constant 0 : index
    %5 = vector.load %arg0[%c0_3, %c0_4] : memref<32x32xf32, #tpu.memory_space<vmem>>, vector<32x32xf32>
    %c0_5 = arith.constant 0 : index
    %c0_6 = arith.constant 0 : index
    %6 = vector.load %arg1[%c0_5, %c0_6] : memref<32x16xf32, #tpu.memory_space<vmem>>, vector<32x16xf32>
    %7 = arith.addf %6, %4 : vector<32x16xf32>
    %cst = arith.constant dense<0.000000e+00> : vector<32x16xf32>
    %8 = tpu.matmul %5, %7, %cst {dimension_numbers = #tpu.dot_dimension_numbers<[1], [0], [0], [1], [0, 0, 1, 1], [], []>} : vector<32x32xf32>, vector<32x16xf32>, vector<32x16xf32> -> vector<32x16xf32>
    %9 = arith.subf %8, %4 : vector<32x16xf32>
    %c0_7 = arith.constant 0 : index
    %c0_8 = arith.constant 0 : index
    %10 = vector.load %arg5[%c0_7, %c0_8] : memref<32x16xf32, #tpu.memory_space<vmem>>, vector<32x16xf32>
    tpu.vector_store %arg5[%c0_7, %c0_8], %9 {strides = array<i32>} : memref<32x16xf32, #tpu.memory_space<vmem>>, vector<32x16xf32>,
    %c0_9 = arith.constant 0 : index
    %c0_10 = arith.constant 0 : index
    %11 = vector.load %arg3[%c0_9, %c0_10] : memref<16x32xf32, #tpu.memory_space<vmem>>, vector<16x32xf32>
    %cst_11 = arith.constant dense<0.000000e+00> : vector<32x32xf32>
    %12 = tpu.matmul %9, %11, %cst_11 {dimension_numbers = #tpu.dot_dimension_numbers<[1], [0], [0], [1], [0, 0, 1, 1], [], []>} : vector<32x16xf32>, vector<16x32xf32>, vector<32x32xf32> -> vector<32x32xf32>
    %13 = vector.broadcast %1 : vector<1x32xf32> to vector<32x32xf32>
    %14 = arith.addf %12, %13 : vector<32x32xf32>
    %cst_12 = arith.constant 0.000000e+00 : f32
    %15 = vector.broadcast %cst_12 : f32 to vector<32x32xf32>
    %16 = arith.maximumf %14, %15 : vector<32x32xf32>
    %c0_13 = arith.constant 0 : index
    %c0_14 = arith.constant 0 : index
    %17 = vector.load %arg4[%c0_13, %c0_14] : memref<32x8xf32, #tpu.memory_space<vmem>>, vector<32x8xf32>
    %cst_15 = arith.constant dense<0.000000e+00> : vector<32x8xf32>
    %18 = tpu.matmul %16, %17, %cst_15 {dimension_numbers = #tpu.dot_dimension_numbers<[1], [0], [0], [1], [0, 0, 1, 1], [], []>} : vector<32x32xf32>, vector<32x8xf32>, vector<32x8xf32> -> vector<32x8xf32>
    %19 = vector.broadcast %2 : vector<1x8xf32> to vector<32x8xf32>
    %20 = arith.addf %18, %19 : vector<32x8xf32>
    %cst_16 = arith.constant dense<0xFF800000> : vector<32xf32>
    %21 = vector.multi_reduction <maximumf>, %20, %cst_16 [1] : vector<32x8xf32> to vector<32xf32>
    %22 = vector.shape_cast %21 : vector<32xf32> to vector<32x1xf32>
    %23 = vector.broadcast %22 : vector<32x1xf32> to vector<32x8xf32>
    %24 = arith.subf %20, %23 : vector<32x8xf32>
    %25 = math.exp %24 : vector<32x8xf32>
    %cst_17 = arith.constant dense<0.000000e+00> : vector<32xf32>
    %26 = vector.multi_reduction <add>, %25, %cst_17 [1] : vector<32x8xf32> to vector<32xf32>
    %27 = vector.shape_cast %26 : vector<32xf32> to vector<32x1xf32>
    %28 = vector.broadcast %27 : vector<32x1xf32> to vector<32x8xf32>
    %29 = arith.divf %25, %28 : vector<32x8xf32>
    %c0_18 = arith.constant 0 : index
    %c0_19 = arith.constant 0 : index
    %30 = vector.load %arg6[%c0_18, %c0_19] : memref<32x8xf32, #tpu.memory_space<vmem>>, vector<32x8xf32>
    tpu.vector_store %arg6[%c0_18, %c0_19], %29 {strides = array<i32>} : memref<32x8xf32, #tpu.memory_space<vmem>>, vector<32x8xf32>,
    return
  }
}

</mosaic_0001>

<llo_original>
// kernel: tpu_custom_call.1
$region0: #{tpu_custom_call.1}
  #allocation0 [shape = 'u32[]', space=smem, size = 0x4, offset = 0x4, fixed_abs, tag = 'smem constant byte address 0x4 - core index']
  #allocation1 [shape = 'u32[72,128]{1,0:T(1,128)}', space=vmem, size = 0x9000, scoped, tag = 'internal scratch']
  %s0 = inlined_call_operand.vmem [shape: f32[32,32], index: 0, kind: input, shape index: {}]
  %s1 = inlined_call_operand.vmem [shape: f32[32,16], index: 1, kind: input, shape index: {}]
  %s2 = inlined_call_operand.vmem [shape: f32[3,32], index: 2, kind: input, shape index: {}]
  %s3 = inlined_call_operand.vmem [shape: f32[16,32], index: 3, kind: input, shape index: {}]
  %s4 = inlined_call_operand.vmem [shape: f32[32,8], index: 4, kind: input, shape index: {}]
  %s5 = inlined_call_operand.vmem [shape: f32[32,16], index: 5, kind: output, shape index: {0}]
  %s6 = inlined_call_operand.vmem [shape: f32[32,8], index: 6, kind: output, shape index: {1}]
  %7 = xla_tuple %s5, %s6
  %s8 = sld [smem:[#allocation0]]
  $region38: #{tpu_custom_call.1} parent=0
    _
  %s10 = ssub.s32 1, %s8
  %s11 = scalar_select 0, %s10, %s8
  // Predicated region
  $region2: #{tpu_custom_call.1} parent=0 // pred_check
    _
  $region3: #{tpu_custom_call.1} parent=0 // pred_check_branch
    %13 = sbr.rel (0) target = $region5
  $region4: #{tpu_custom_call.1} parent=0 // pred_region
    _
  $region5: #{tpu_custom_call.1} parent=0 // pred_fallthru
    _
  // Predicated region
  $region6: #{tpu_custom_call.1} parent=0 // pred_check
    _
  $region7: #{tpu_custom_call.1} parent=0 // pred_check_branch
    %15 = sbr.rel (0) target = $region9
  $region8: #{tpu_custom_call.1} parent=0 // pred_region
    _
  $region9: #{tpu_custom_call.1} parent=0 // pred_fallthru
    _
  // Predicated region
  $region10: #{tpu_custom_call.1} parent=0 // pred_check
    _
  $region11: #{tpu_custom_call.1} parent=0 // pred_check_branch
    %17 = sbr.rel (0) target = $region13
  $region12: #{tpu_custom_call.1} parent=0 // pred_region
    _
  $region13: #{tpu_custom_call.1} parent=0 // pred_fallthru
    _
  // Predicated region
  $region14: #{tpu_custom_call.1} parent=0 // pred_check
    _
  $region15: #{tpu_custom_call.1} parent=0 // pred_check_branch
    %19 = sbr.rel (0) target = $region17
  $region16: #{tpu_custom_call.1} parent=0 // pred_region
    _
  $region17: #{tpu_custom_call.1} parent=0 // pred_fallthru
    _
  // Predicated region
  $region18: #{tpu_custom_call.1} parent=0 // pred_check
    _
  $region19: #{tpu_custom_call.1} parent=0 // pred_check_branch
    %21 = sbr.rel (0) target = $region21
  $region20: #{tpu_custom_call.1} parent=0 // pred_region
    _
  $region21: #{tpu_custom_call.1} parent=0 // pred_fallthru
    _
  %v22 = vld [vmem:[%s2] sm:$0x1]
  %v23 = vld [vmem:[%s2 + $0x1] sm:$0x1]
  %v24 = vld [vmem:[%s2 + $0x2] sm:$0x1]
  %v25 = vperm.slane %v22, 0
  %v26 = vld [vmem:[%s0] sm:$0xff]
  %v27 = vld [vmem:[%s0 + $0x8] sm:$0xff]
  %v28 = vld [vmem:[%s0 + $0x10] sm:$0xff]
  %v29 = vld [vmem:[%s0 + $0x18] sm:$0xff]
  %v30 = vld [vmem:[%s1] sm:$0xff]
  %v31 = vld [vmem:[%s1 + $0x8] sm:$0xff]
  %v32 = vld [vmem:[%s1 + $0x10] sm:$0xff]
  %v33 = vld [vmem:[%s1 + $0x18] sm:$0xff]
  %v34 = vadd.f32 %v30, %v25
  %v35 = vadd.f32 %v31, %v25
  %v36 = vadd.f32 %v32, %v25
  %v37 = vadd.f32 %v33, %v25
  %vm38 = vcmask 261120
  %v40 = vsel %vm38, %v26, 0
  %v43 = vsel %vm38, %v27, 0
  %v46 = vsel %vm38, %v28, 0
  %v49 = vsel %vm38, %v29, 0
  %51 = vmatpush.msra.mxu0 0.0
  %52 = vmatpush.msra.mxu0 0.0
  %53 = vmatpush.msra.mxu0 0.0
  %54 = vmatpush.msra.mxu0 0.0
  %55 = vmatpush.msra.mxu0 0.0
  %56 = vmatpush.msra.mxu0 0.0
  %57 = vmatpush.msra.mxu0 0.0
  %58 = vmatpush.msra.mxu0 0.0
  %59 = vmatpush.msra.mxu0 0.0
  %60 = vmatpush.msra.mxu0 0.0
  %61 = vmatpush.msra.mxu0 0.0
  %62 = vmatpush.msra.mxu0 0.0
  %63 = vmatpush.msra.mxu0 %v37
  %64 = vmatpush.msra.mxu0 %v36
  %65 = vmatpush.msra.mxu0 %v35
  %66 = vmatpush.msra.mxu0 %v34
  %67 = vmatmul.f32.gmra.mxu0 %v40
  %v68 = vpop.f32.mrf.mxu0
  %v69 = vadd.f32 0.0, %v68
  %70 = vmatmul.f32.gmra.mxu0 %v43
  %v71 = vpop.f32.mrf.mxu0
  %v72 = vadd.f32 0.0, %v71
  %73 = vmatmul.f32.gmra.mxu0 %v46
  %v74 = vpop.f32.mrf.mxu0
  %v75 = vadd.f32 0.0, %v74
  %76 = vmatmul.f32.gmra.mxu0 %v49
  %v77 = vpop.f32.mrf.mxu0
  %v78 = vadd.f32 0.0, %v77
  %79 = vdwg.mxu0
  %v80 = vsub.f32 %v69, %v25
  %v81 = vsub.f32 %v72, %v25
  %v82 = vsub.f32 %v75, %v25
  %v83 = vsub.f32 %v78, %v25
  %vm84 = vcmask 130048
  %85 = vst.msk [vmem:[%s5] sm:$0xff] %vm84, %v80
  %86 = vst.msk [vmem:[%s5 + $0x8] sm:$0xff] %vm84, %v81
  %87 = vst.msk [vmem:[%s5 + $0x10] sm:$0xff] %vm84, %v82
  %88 = vst.msk [vmem:[%s5 + $0x18] sm:$0xff] %vm84, %v83
  %v89 = vld [vmem:[%s3] sm:$0xff]
  %v90 = vld [vmem:[%s3 + $0x8] sm:$0xff]
  %v91 = vperm.slane %v23, 0
  %v93 = vsel %vm84, %v80, 0
  %v96 = vsel %vm84, %v81, 0
  %v99 = vsel %vm84, %v82, 0
  %v102 = vsel %vm84, %v83, 0
  %104 = vmatpush.msra.mxu0 0.0
  %105 = vmatpush.msra.mxu0 0.0
  %106 = vmatpush.msra.mxu0 0.0
  %107 = vmatpush.msra.mxu0 0.0
  %108 = vmatpush.msra.mxu0 0.0
  %109 = vmatpush.msra.mxu0 0.0
  %110 = vmatpush.msra.mxu0 0.0
  %111 = vmatpush.msra.mxu0 0.0
  %112 = vmatpush.msra.mxu0 0.0
  %113 = vmatpush.msra.mxu0 0.0
  %114 = vmatpush.msra.mxu0 0.0
  %115 = vmatpush.msra.mxu0 0.0
  %116 = vmatpush.msra.mxu0 0.0
  %117 = vmatpush.msra.mxu0 0.0
  %118 = vmatpush.msra.mxu0 %v90
  %119 = vmatpush.msra.mxu0 %v89
  %120 = vmatmul.f32.gmra.mxu0 %v93
  %v121 = vpop.f32.mrf.mxu0
  %v122 = vadd.f32 %v91, %v121
  %123 = vmatmul.f32.gmra.mxu0 %v96
  %v124 = vpop.f32.mrf.mxu0
  %v125 = vadd.f32 %v91, %v124
  %126 = vmatmul.f32.gmra.mxu0 %v99
  %v127 = vpop.f32.mrf.mxu0
  %v128 = vadd.f32 %v91, %v127
  %129 = vmatmul.f32.gmra.mxu0 %v102
  %v130 = vpop.f32.mrf.mxu0
  %v131 = vadd.f32 %v91, %v130
  %132 = vdwg.mxu0
  %v133 = vmax.f32 %v122, 0.0
  %v134 = vmax.f32 %v125, 0.0
  %v135 = vmax.f32 %v128, 0.0
  %v136 = vmax.f32 %v131, 0.0
  %v137 = vld [vmem:[%s4] sm:$0xff]
  %v138 = vld [vmem:[%s4 + $0x8] sm:$0xff]
  %v139 = vld [vmem:[%s4 + $0x10] sm:$0xff]
  %v140 = vld [vmem:[%s4 + $0x18] sm:$0xff]
  %v141 = vperm.slane %v24, 0
  %v143 = vsel %vm38, %v133, 0
  %v146 = vsel %vm38, %v134, 0
  %v149 = vsel %vm38, %v135, 0
  %v152 = vsel %vm38, %v136, 0
  %154 = vmatpush.msra.mxu0 0.0
  %155 = vmatpush.msra.mxu0 0.0
  %156 = vmatpush.msra.mxu0 0.0
  %157 = vmatpush.msra.mxu0 0.0
  %158 = vmatpush.msra.mxu0 0.0
  %159 = vmatpush.msra.mxu0 0.0
  %160 = vmatpush.msra.mxu0 0.0
  %161 = vmatpush.msra.mxu0 0.0
  %162 = vmatpush.msra.mxu0 0.0
  %163 = vmatpush.msra.mxu0 0.0
  %164 = vmatpush.msra.mxu0 0.0
  %165 = vmatpush.msra.mxu0 0.0
  %166 = vmatpush.msra.mxu0 %v140
  %167 = vmatpush.msra.mxu0 %v139
  %168 = vmatpush.msra.mxu0 %v138
  %169 = vmatpush.msra.mxu0 %v137
  %170 = vmatmul.f32.gmra.mxu0 %v143
  %v171 = vpop.f32.mrf.mxu0
  %v172 = vadd.f32 %v141, %v171
  %173 = vmatmul.f32.gmra.mxu0 %v146
  %v174 = vpop.f32.mrf.mxu0
  %v175 = vadd.f32 %v141, %v174
  %176 = vmatmul.f32.gmra.mxu0 %v149
  %v177 = vpop.f32.mrf.mxu0
  %v178 = vadd.f32 %v141, %v177
  %179 = vmatmul.f32.gmra.mxu0 %v152
  %v180 = vpop.f32.mrf.mxu0
  %v181 = vadd.f32 %v141, %v180
  %182 = vdwg.mxu0
  %vm183 = vcmask 64512
  %v184 = vsel %vm183, %v172, -inf
  %185 = vmax.xlane.f32.xlu0 %v184
  %v186 = vpop.xlane.xlu0 %185
  %v187 = vsel %vm183, %v175, -inf
  %188 = vmax.xlane.f32.xlu0 %v187
  %v189 = vpop.xlane.xlu0 %188
  %v190 = vsel %vm183, %v178, -inf
  %191 = vmax.xlane.f32.xlu0 %v190
  %v192 = vpop.xlane.xlu0 %191
  %v193 = vsel %vm183, %v181, -inf
  %194 = vmax.xlane.f32.xlu0 %v193
  %v195 = vpop.xlane.xlu0 %194
  %v196 = vsub.f32 %v172, %v186
  %v197 = vsub.f32 %v175, %v189
  %v198 = vsub.f32 %v178, %v192
  %v199 = vsub.f32 %v181, %v195
  %v200 = vmul.f32 %v196, 1.442695
  %v201 = vpow.pop %v200
  %v202 = vmul.f32 %v197, 1.442695
  %v203 = vpow.pop %v202
  %v204 = vmul.f32 %v198, 1.442695
  %v205 = vpow.pop %v204
  %v206 = vmul.f32 %v199, 1.442695
  %v207 = vpow.pop %v206
  %v208 = vsel %vm183, %v201, 0.0
  %209 = vadd.xlane.f32.xlu0 %v208
  %v210 = vpop.xlane.xlu0 %209
  %v211 = vsel %vm183, %v203, 0.0
  %212 = vadd.xlane.f32.xlu0 %v211
  %v213 = vpop.xlane.xlu0 %212
  %v214 = vsel %vm183, %v205, 0.0
  %215 = vadd.xlane.f32.xlu0 %v214
  %v216 = vpop.xlane.xlu0 %215
  %v217 = vsel %vm183, %v207, 0.0
  %218 = vadd.xlane.f32.xlu0 %v217
  %v219 = vpop.xlane.xlu0 %218
  %v220 = vrcp.pop %v210
  %v221 = vmul.f32 %v210, %v220
  %v222 = vsub.f32 1.0, %v221
  %v223 = vmul.f32 %v220, %v222
  %v224 = vadd.f32 %v220, %v223
  %vm225 = vweird.f32 %v210
  %vm226 = vweird.f32 %v220
  %vm227 = vmor %vm225, %vm226
  %v228 = vsel %vm227, %v220, %v224
  %v229 = vand.u32 2147483647, %v210
  %vm230 = vcmp.eq.f32.partialorder %v229, 8.507059e+37
  %v231 = vand.u32 %v210, 2147483648
  %v232 = vor.u32 1.1754944e-38, %v231
  %v233 = vsel %vm230, %v232, %v228
  %v234 = vmul.f32 %v201, %v233
  %v235 = vrcp.pop %v213
  %v236 = vmul.f32 %v213, %v235
  %v237 = vsub.f32 1.0, %v236
  %v238 = vmul.f32 %v235, %v237
  %v239 = vadd.f32 %v235, %v238
  %vm240 = vweird.f32 %v213
  %vm241 = vweird.f32 %v235
  %vm242 = vmor %vm240, %vm241
  %v243 = vsel %vm242, %v235, %v239
  %v244 = vand.u32 2147483647, %v213
  %vm245 = vcmp.eq.f32.partialorder %v244, 8.507059e+37
  %v246 = vand.u32 %v213, 2147483648
  %v247 = vor.u32 1.1754944e-38, %v246
  %v248 = vsel %vm245, %v247, %v243
  %v249 = vmul.f32 %v203, %v248
  %v250 = vrcp.pop %v216
  %v251 = vmul.f32 %v216, %v250
  %v252 = vsub.f32 1.0, %v251
  %v253 = vmul.f32 %v250, %v252
  %v254 = vadd.f32 %v250, %v253
  %vm255 = vweird.f32 %v216
  %vm256 = vweird.f32 %v250
  %vm257 = vmor %vm255, %vm256
  %v258 = vsel %vm257, %v250, %v254
  %v259 = vand.u32 2147483647, %v216
  %vm260 = vcmp.eq.f32.partialorder %v259, 8.507059e+37
  %v261 = vand.u32 %v216, 2147483648
  %v262 = vor.u32 1.1754944e-38, %v261
  %v263 = vsel %vm260, %v262, %v258
  %v264 = vmul.f32 %v205, %v263
  %v265 = vrcp.pop %v219
  %v266 = vmul.f32 %v219, %v265
  %v267 = vsub.f32 1.0, %v266
  %v268 = vmul.f32 %v265, %v267
  %v269 = vadd.f32 %v265, %v268
  %vm270 = vweird.f32 %v219
  %vm271 = vweird.f32 %v265
  %vm272 = vmor %vm270, %vm271
  %v273 = vsel %vm272, %v265, %v269
  %v274 = vand.u32 2147483647, %v219
  %vm275 = vcmp.eq.f32.partialorder %v274, 8.507059e+37
  %v276 = vand.u32 %v219, 2147483648
  %v277 = vor.u32 1.1754944e-38, %v276
  %v278 = vsel %vm275, %v277, %v273
  %v279 = vmul.f32 %v207, %v278
  %280 = vst.msk [vmem:[%s6] sm:$0xff] %vm183, %v234
  %281 = vst.msk [vmem:[%s6 + $0x8] sm:$0xff] %vm183, %v249
  %282 = vst.msk [vmem:[%s6 + $0x10] sm:$0xff] %vm183, %v264
  %283 = vst.msk [vmem:[%s6 + $0x18] sm:$0xff] %vm183, %v279
  // Predicated region
  $region22: #{tpu_custom_call.1} parent=0 // pred_check
    _
  $region23: #{tpu_custom_call.1} parent=0 // pred_check_branch
    %285 = sbr.rel (0) target = $region25
  $region24: #{tpu_custom_call.1} parent=0 // pred_region
    _
  $region25: #{tpu_custom_call.1} parent=0 // pred_fallthru
    _
  // Predicated region
  $region26: #{tpu_custom_call.1} parent=0 // pred_check
    _
  $region27: #{tpu_custom_call.1} parent=0 // pred_check_branch
    %287 = sbr.rel (0) target = $region29
  $region28: #{tpu_custom_call.1} parent=0 // pred_region
    _
  $region29: #{tpu_custom_call.1} parent=0 // pred_fallthru
    _
  // Predicated region
  $region30: #{tpu_custom_call.1} parent=0 // pred_check
    _
  $region31: #{tpu_custom_call.1} parent=0 // pred_check_branch
    %289 = sbr.rel (0) target = $region33
  $region32: #{tpu_custom_call.1} parent=0 // pred_region
    _
  $region33: #{tpu_custom_call.1} parent=0 // pred_fallthru
    _
  // Predicated region
  $region34: #{tpu_custom_call.1} parent=0 // pred_check
    _
  $region35: #{tpu_custom_call.1} parent=0 // pred_check_branch
    %291 = sbr.rel (0) target = $region37
  $region36: #{tpu_custom_call.1} parent=0 // pred_region
    _
  $region37: #{tpu_custom_call.1} parent=0 // pred_fallthru
    _

</llo_original>
